<compile_context>
chip_gen: v7x
topology: tpu7x:2x2x1
jax: 0.10.0
libtpu: 0.0.40
codegen_flags: <defaults>
</compile_context>

<pallas_src>
import jax
import jax.numpy as jnp
from jax.experimental import pallas as pl
from jax.experimental.pallas import tpu as pltpu


_TM_CAP = 1024            # row-tile cap
_TK_CAP = 2048            # contraction (node) tile cap
_A_DTYPE = jnp.bfloat16   # adjacency storage dtype
_ACT_DTYPE = jnp.bfloat16 # X / inter-kernel activation storage dtype
_W_DTYPE = jnp.bfloat16   # weight storage dtype (biases stay f32)
_VMEM_LIMIT = 32 * 1024 * 1024


def _round_up(n, m):
    return (n + m - 1) // m * m


def _pick_tile(n_pad, cap):
    """Largest multiple-of-128 divisor of n_pad that is <= cap (n_pad % 128 == 0)."""
    best = 128
    t = 256
    lim = min(cap, n_pad)
    while t <= lim:
        if n_pad % t == 0:
            best = t
        t += 128
    return best


# ------------------------------- kernels ----------------------------------

def _conv1_kernel(a_ref, x_ref, w1_ref, b1_ref, w2_ref, m2_ref, acc_ref):
    # M2 = relu(A @ (X @ W1) + b1) @ W2f   (W2f has eval-mode BN1 scale folded)
    k = pl.program_id(1)
    f32 = jnp.float32

    # conv1 feature transform fused into the aggregation loop.
    m1_blk = jnp.dot(x_ref[...], w1_ref[...], preferred_element_type=f32)
    part = jnp.dot(a_ref[...], m1_blk.astype(a_ref.dtype),
                   preferred_element_type=f32)

    @pl.when(k == 0)
    def _():
        acc_ref[...] = part          # write-first: no zero-init + reload

    @pl.when(k > 0)
    def _():
        acc_ref[...] += part

    @pl.when(k == pl.num_programs(1) - 1)
    def _():
        h = jnp.maximum(acc_ref[...] + b1_ref[...], 0.0).astype(jnp.bfloat16)
        m2 = jnp.dot(h, w2_ref[...], preferred_element_type=f32)
        m2_ref[...] = m2.astype(m2_ref.dtype)


def _conv2_mlp_kernel(a_ref, m2_ref, b2_ref, w3_ref, b3_ref, w4_ref, b4_ref,
                      w5_ref, b5_ref, o_ref, acc_ref):
    # out = lin4( relu(BN3(lin3( relu(BN2(lin2( relu(BN1(A@M2 + b2)) )))))) )
    # with eval-mode BN folded into w/b and dropout = identity.
    k = pl.program_id(1)
    f32 = jnp.float32

    part = jnp.dot(a_ref[...], m2_ref[...], preferred_element_type=f32)

    @pl.when(k == 0)
    def _():
        acc_ref[...] = part

    @pl.when(k > 0)
    def _():
        acc_ref[...] += part

    @pl.when(k == pl.num_programs(1) - 1)
    def _():
        h = jnp.maximum(acc_ref[...] + b2_ref[...], 0.0).astype(jnp.bfloat16)
        h = jnp.maximum(
            jnp.dot(h, w3_ref[...], preferred_element_type=f32) + b3_ref[...],
            0.0).astype(jnp.bfloat16)
        h = jnp.maximum(
            jnp.dot(h, w4_ref[...], preferred_element_type=f32) + b4_ref[...],
            0.0).astype(jnp.bfloat16)
        o_ref[...] = (jnp.dot(h, w5_ref[...], preferred_element_type=f32)
                      + b5_ref[...])


# ------------------------------- wrapper -----------------------------------

def gcn_forward(x, a_norm, params):
    f32 = jnp.float32
    n = x.shape[0]
    n_pad = _round_up(n, 128)

    # tm capped at n_pad//2 when possible -> >=2 blocks on the parallel axis
    # (v7x megacore); tk as large as divides n_pad (<= cap).
    tm_cap = _TM_CAP if n_pad < 256 else min(_TM_CAP, n_pad // 2)
    tm = _pick_tile(n_pad, tm_cap)
    tk = _pick_tile(n_pad, _TK_CAP)
    gm, gk = n_pad // tm, n_pad // tk

    c_in, c_h = params["w1"].shape
    c1 = params["w2"].shape[1]
    c2 = params["w3"].shape[1]
    c3 = params["w4"].shape[1]
    c4 = params["w5"].shape[1]

    # Zero-pad nodes (rows) and features (lanes) — padded rows/cols contribute 0
    # to the real rows; padded output rows are sliced off at the end.
    xp = jnp.zeros((n_pad, c_in), _ACT_DTYPE).at[:n, :x.shape[1]].set(
        x.astype(_ACT_DTYPE))
    ap = jnp.zeros((n_pad, n_pad), _A_DTYPE).at[:n, :n].set(
        a_norm.astype(_A_DTYPE))

    cp = pltpu.CompilerParams(dimension_semantics=("parallel", "arbitrary"),
                              vmem_limit_bytes=_VMEM_LIMIT)

    def res(shape):   # grid-resident (constant index_map) full-block spec
        return pl.BlockSpec(shape, lambda i, k: (0, 0))

    # --- kernel 1: M2 = relu(A @ (X @ W1) + b1) @ W2f ---
    m2 = pl.pallas_call(
        _conv1_kernel,
        out_shape=jax.ShapeDtypeStruct((n_pad, c1), _ACT_DTYPE),
        grid=(gm, gk),
        in_specs=[pl.BlockSpec((tm, tk), lambda i, k: (i, k)),
                  pl.BlockSpec((tk, c_in), lambda i, k: (k, 0)),
                  res((c_in, c_h)),
                  res((1, c_h)),
                  res((c_h, c1))],
        out_specs=pl.BlockSpec((tm, c1), lambda i, k: (i, 0)),
        scratch_shapes=[pltpu.VMEM((tm, c_h), f32)],
        compiler_params=cp,
    )(ap, xp, params["w1"], params["b1"], params["w2"])

    # --- kernel 2: out = MLP_head(relu(A @ M2 + b2f)) ---
    out = pl.pallas_call(
        _conv2_mlp_kernel,
        out_shape=jax.ShapeDtypeStruct((n_pad, c4), f32),
        grid=(gm, gk),
        in_specs=[pl.BlockSpec((tm, tk), lambda i, k: (i, k)),
                  pl.BlockSpec((tk, c1), lambda i, k: (k, 0)),
                  res((1, c1)),
                  res((c1, c2)), res((1, c2)),
                  res((c2, c3)), res((1, c3)),
                  res((c3, c4)), res((1, c4))],
        out_specs=pl.BlockSpec((tm, c4), lambda i, k: (i, 0)),
        scratch_shapes=[pltpu.VMEM((tm, c1), f32)],
        compiler_params=cp,
    )(ap, m2, params["b2"], params["w3"], params["b3"],
      params["w4"], params["b4"], params["w5"], params["b5"])

    return out[:n, :1]


# ----------------------------- plain-JAX glue -------------------------------

def build_norm_adj(edge_index, num_nodes):
    """Dense symmetric-normalized adjacency with self loops (PyG GCNConv norm)."""
    src = edge_index[0]
    dst = edge_index[1]
    loop = jnp.arange(num_nodes, dtype=edge_index.dtype)
    src = jnp.concatenate([src, loop])
    dst = jnp.concatenate([dst, loop])
    deg = jnp.zeros((num_nodes,), jnp.float32).at[dst].add(1.0)
    dinv = jnp.where(deg > 0, jax.lax.rsqrt(deg), 0.0)
    w = dinv[src] * dinv[dst]
    # row i aggregates messages from column j (edge j -> i)
    a = jnp.zeros((num_nodes, num_nodes), jnp.float32).at[dst, src].add(w)
    return a


def init_params(key, hidden_channels):
    """PyTorch-style init, eval-mode BN folded in, padded to 128 lanes, bf16 weights."""
    ks = jax.random.split(key, 10)
    f32 = jnp.float32

    def uni(k, shape, fan_in):
        bound = 1.0 / jnp.sqrt(jnp.float32(fan_in))
        return jax.random.uniform(k, shape, f32, -bound, bound)

    def bn_fold(c):
        # gamma=1, beta=0, running_mean=0, running_var=1, eps=1e-5 (eval mode)
        gamma = jnp.ones((c,), f32)
        beta = jnp.zeros((c,), f32)
        mean = jnp.zeros((c,), f32)
        var = jnp.ones((c,), f32)
        scale = gamma * jax.lax.rsqrt(var + 1e-5)
        shift = beta - mean * scale
        return scale, shift

    # Raw (unpadded) weights; GCNConv / Linear weights stored as (in, out).
    w1 = uni(ks[0], (21, hidden_channels), 21)
    b1 = uni(ks[1], (hidden_channels,), 21)
    w2 = uni(ks[2], (hidden_channels, 112), hidden_channels)
    b2 = uni(ks[3], (112,), hidden_channels)
    w3 = uni(ks[4], (112, 256), 112)
    b3 = uni(ks[5], (256,), 112)
    w4 = uni(ks[6], (256, 100), 256)
    b4 = uni(ks[7], (100,), 256)
    w5 = uni(ks[8], (100, 1), 100)
    b5 = uni(ks[9], (1,), 100)

    # Fold eval-mode BatchNorm into the preceding matmul (per-output-channel
    # column scaling commutes with the A aggregation for conv2).
    s1, t1 = bn_fold(112)
    s2, t2 = bn_fold(256)
    s3, t3 = bn_fold(100)
    w2f, b2f = w2 * s1, b2 * s1 + t1
    w3f, b3f = w3 * s2, b3 * s2 + t2
    w4f, b4f = w4 * s3, b4 * s3 + t3

    c_in = _round_up(21, 128)
    c_h = _round_up(hidden_channels, 128)
    c1 = _round_up(112, 128)
    c2 = _round_up(256, 128)
    c3 = _round_up(100, 128)
    c4 = _round_up(1, 128)

    def padw(w, r, c):
        return jnp.zeros((r, c), f32).at[:w.shape[0], :w.shape[1]].set(w).astype(_W_DTYPE)

    def padb(b, c):
        return jnp.zeros((1, c), f32).at[0, :b.shape[0]].set(b)

    return {
        "w1": padw(w1, c_in, c_h), "b1": padb(b1, c_h),
        "w2": padw(w2f, c_h, c1), "b2": padb(b2f, c1),
        "w3": padw(w3f, c1, c2), "b3": padb(b3f, c2),
        "w4": padw(w4f, c2, c3), "b4": padb(b4f, c3),
        "w5": padw(w5, c3, c4), "b5": padb(b5, c4),
    }


if __name__ == "__main__":
    key = jax.random.PRNGKey(0)
    k_x, k_e, k_p = jax.random.split(key, 3)

    num_nodes = 16
    num_edges = 48
    hidden_channels = 32

    x = jax.random.normal(k_x, (num_nodes, 21), jnp.float32)
    edge_index = jax.random.randint(k_e, (2, num_edges), 0, num_nodes, jnp.int32)

    a_norm = build_norm_adj(edge_index, num_nodes)
    params = init_params(k_p, hidden_channels)

    out = gcn_forward(x, a_norm, params)
    out = jax.block_until_ready(out)
    assert out.shape == (num_nodes, 1), out.shape
    assert bool(jnp.all(jnp.isfinite(out)))
    print("KERNEL_OK")
</pallas_src>

<mosaic_0001>
module attributes {stable_mosaic.version = 11 : i64} {
  func.func @_conv1_kernel(%arg0: i32, %arg1: i32, %arg2: memref<128x128xbf16, #tpu.memory_space<vmem>>, %arg3: memref<128x128xbf16, #tpu.memory_space<vmem>>, %arg4: memref<128x128xbf16, #tpu.memory_space<vmem>>, %arg5: memref<1x128xf32, #tpu.memory_space<vmem>>, %arg6: memref<128x128xbf16, #tpu.memory_space<vmem>>, %arg7: memref<128x128xbf16, #tpu.memory_space<vmem>>, %arg8: memref<128x128xf32, #tpu.memory_space<vmem>>) attributes {dimension_semantics = [#tpu.dimension_semantics<parallel>, #tpu.dimension_semantics<arbitrary>], iteration_bounds = array<i64: 1, 1>, scalar_prefetch = 0 : i64, scratch_operands = 1 : i64, tpu.core_type = #tpu.core_type<tc>, window_params = [{transform_indices = @transform_0, window_bounds = array<i64: 128, 128>}, {transform_indices = @transform_1, window_bounds = array<i64: 128, 128>}, {pipeline_mode = #tpu.pipeline_mode<synchronous>, transform_indices = @transform_2, window_bounds = array<i64: 128, 128>}, {pipeline_mode = #tpu.pipeline_mode<synchronous>, transform_indices = @transform_3, window_bounds = array<i64: 1, 128>}, {pipeline_mode = #tpu.pipeline_mode<synchronous>, transform_indices = @transform_4, window_bounds = array<i64: 128, 128>}, {transform_indices = @transform_5, window_bounds = array<i64: 128, 128>}]} {
    %c0 = arith.constant 0 : index
    %c0_0 = arith.constant 0 : index
    %0 = vector.load %arg3[%c0, %c0_0] : memref<128x128xbf16, #tpu.memory_space<vmem>>, vector<128x128xbf16>
    %c0_1 = arith.constant 0 : index
    %c0_2 = arith.constant 0 : index
    %1 = vector.load %arg4[%c0_1, %c0_2] : memref<128x128xbf16, #tpu.memory_space<vmem>>, vector<128x128xbf16>
    %cst = arith.constant dense<0.000000e+00> : vector<128x128xf32>
    %2 = tpu.matmul %0, %1, %cst {dimension_numbers = #tpu.dot_dimension_numbers<[1], [0], [0], [1], [0, 0, 1, 1], [], []>} : vector<128x128xbf16>, vector<128x128xbf16>, vector<128x128xf32> -> vector<128x128xf32>
    %c0_3 = arith.constant 0 : index
    %c0_4 = arith.constant 0 : index
    %3 = vector.load %arg2[%c0_3, %c0_4] : memref<128x128xbf16, #tpu.memory_space<vmem>>, vector<128x128xbf16>
    %4 = arith.truncf %2 : vector<128x128xf32> to vector<128x128xbf16>
    %cst_5 = arith.constant dense<0.000000e+00> : vector<128x128xf32>
    %5 = tpu.matmul %3, %4, %cst_5 {dimension_numbers = #tpu.dot_dimension_numbers<[1], [0], [0], [1], [0, 0, 1, 1], [], []>} : vector<128x128xbf16>, vector<128x128xbf16>, vector<128x128xf32> -> vector<128x128xf32>
    %c0_i32 = arith.constant 0 : i32
    %6 = arith.cmpi eq, %arg1, %c0_i32 : i32
    %7 = arith.extui %6 : i1 to i32
    %c0_i32_6 = arith.constant 0 : i32
    %8 = arith.cmpi ne, %7, %c0_i32_6 : i32
    scf.if %8 {
      %c0_11 = arith.constant 0 : index
      %c0_12 = arith.constant 0 : index
      %15 = vector.load %arg8[%c0_11, %c0_12] : memref<128x128xf32, #tpu.memory_space<vmem>>, vector<128x128xf32>
      tpu.vector_store %arg8[%c0_11, %c0_12], %5 {strides = array<i32>} : memref<128x128xf32, #tpu.memory_space<vmem>>, vector<128x128xf32>,
    } else {
    }
    %c0_i32_7 = arith.constant 0 : i32
    %9 = arith.cmpi sgt, %arg1, %c0_i32_7 : i32
    %10 = arith.extui %9 : i1 to i32
    %c0_i32_8 = arith.constant 0 : i32
    %11 = arith.cmpi ne, %10, %c0_i32_8 : i32
    scf.if %11 {
      %c0_11 = arith.constant 0 : index
      %c0_12 = arith.constant 0 : index
      %15 = vector.load %arg8[%c0_11, %c0_12] : memref<128x128xf32, #tpu.memory_space<vmem>>, vector<128x128xf32>
      %16 = arith.addf %15, %5 : vector<128x128xf32>
      %c0_13 = arith.constant 0 : index
      %c0_14 = arith.constant 0 : index
      %17 = vector.load %arg8[%c0_13, %c0_14] : memref<128x128xf32, #tpu.memory_space<vmem>>, vector<128x128xf32>
      tpu.vector_store %arg8[%c0_13, %c0_14], %16 {strides = array<i32>} : memref<128x128xf32, #tpu.memory_space<vmem>>, vector<128x128xf32>,
    } else {
    }
    %c0_i32_9 = arith.constant 0 : i32
    %12 = arith.cmpi eq, %arg1, %c0_i32_9 : i32
    %13 = arith.extui %12 : i1 to i32
    %c0_i32_10 = arith.constant 0 : i32
    %14 = arith.cmpi ne, %13, %c0_i32_10 : i32
    scf.if %14 {
      %c0_11 = arith.constant 0 : index
      %c0_12 = arith.constant 0 : index
      %15 = vector.load %arg8[%c0_11, %c0_12] : memref<128x128xf32, #tpu.memory_space<vmem>>, vector<128x128xf32>
      %c0_13 = arith.constant 0 : index
      %c0_14 = arith.constant 0 : index
      %16 = vector.load %arg5[%c0_13, %c0_14] : memref<1x128xf32, #tpu.memory_space<vmem>>, vector<1x128xf32>
      %17 = vector.broadcast %16 : vector<1x128xf32> to vector<128x128xf32>
      %18 = arith.addf %15, %17 : vector<128x128xf32>
      %cst_15 = arith.constant 0.000000e+00 : f32
      %19 = vector.broadcast %cst_15 : f32 to vector<128x128xf32>
      %20 = arith.maximumf %18, %19 : vector<128x128xf32>
      %21 = arith.truncf %20 : vector<128x128xf32> to vector<128x128xbf16>
      %c0_16 = arith.constant 0 : index
      %c0_17 = arith.constant 0 : index
      %22 = vector.load %arg6[%c0_16, %c0_17] : memref<128x128xbf16, #tpu.memory_space<vmem>>, vector<128x128xbf16>
      %cst_18 = arith.constant dense<0.000000e+00> : vector<128x128xf32>
      %23 = tpu.matmul %21, %22, %cst_18 {dimension_numbers = #tpu.dot_dimension_numbers<[1], [0], [0], [1], [0, 0, 1, 1], [], []>} : vector<128x128xbf16>, vector<128x128xbf16>, vector<128x128xf32> -> vector<128x128xf32>
      %24 = arith.truncf %23 : vector<128x128xf32> to vector<128x128xbf16>
      %c0_19 = arith.constant 0 : index
      %c0_20 = arith.constant 0 : index
      %25 = vector.load %arg7[%c0_19, %c0_20] : memref<128x128xbf16, #tpu.memory_space<vmem>>, vector<128x128xbf16>
      tpu.vector_store %arg7[%c0_19, %c0_20], %24 {strides = array<i32>} : memref<128x128xbf16, #tpu.memory_space<vmem>>, vector<128x128xbf16>,
    } else {
    }
    return
  }
  func.func @transform_0(%arg0: i32, %arg1: i32) -> (i32, i32) {
    %c0_i32 = arith.constant 0 : i32
    return %arg0, %arg1 : i32, i32
  }
  func.func @transform_1(%arg0: i32, %arg1: i32) -> (i32, i32) {
    %c0_i32 = arith.constant 0 : i32
    %c0_i32_0 = arith.constant 0 : i32
    return %arg1, %c0_i32 : i32, i32
  }
  func.func @transform_2(%arg0: i32, %arg1: i32) -> (i32, i32) {
    %c0_i32 = arith.constant 0 : i32
    %c0_i32_0 = arith.constant 0 : i32
    %c0_i32_1 = arith.constant 0 : i32
    return %c0_i32, %c0_i32_0 : i32, i32
  }
  func.func @transform_3(%arg0: i32, %arg1: i32) -> (i32, i32) {
    %c0_i32 = arith.constant 0 : i32
    %c0_i32_0 = arith.constant 0 : i32
    %c0_i32_1 = arith.constant 0 : i32
    return %c0_i32, %c0_i32_0 : i32, i32
  }
  func.func @transform_4(%arg0: i32, %arg1: i32) -> (i32, i32) {
    %c0_i32 = arith.constant 0 : i32
    %c0_i32_0 = arith.constant 0 : i32
    %c0_i32_1 = arith.constant 0 : i32
    return %c0_i32, %c0_i32_0 : i32, i32
  }
  func.func @transform_5(%arg0: i32, %arg1: i32) -> (i32, i32) {
    %c0_i32 = arith.constant 0 : i32
    %c0_i32_0 = arith.constant 0 : i32
    return %arg0, %c0_i32 : i32, i32
  }
}

</mosaic_0001>

<llo_original>
// kernel: tpu_custom_call.1
$region0: #{tpu_custom_call.1}
  #allocation0 [shape = 'u32[]', space=smem, size = 0x4, offset = 0x4, fixed_abs, tag = 'smem constant byte address 0x4 - core index']
  #allocation1 [shape = 'u32[144,128]{1,0:T(1,128)}', space=vmem, size = 0x12000, scoped, tag = 'internal scratch']
  #allocation2 [shape = 'f32[128,128]{1,0:T(8,128)}', space=vmem, size = 0x10000, scoped, tag = 'scratch operand']
  %s0 = inlined_call_operand.hbm [shape: bf16[128,128], index: 0, kind: input, shape index: {}]
  %s1 = inlined_call_operand.hbm [shape: bf16[128,128], index: 1, kind: input, shape index: {}]
  %s2 = inlined_call_operand.hbm [shape: bf16[128,128], index: 2, kind: input, shape index: {}]
  %s3 = inlined_call_operand.vmem [shape: f32[1,128], index: 3, kind: input, shape index: {}]
  %s4 = inlined_call_operand.hbm [shape: bf16[128,128], index: 4, kind: input, shape index: {}]
  %s5 = inlined_call_operand.hbm [shape: bf16[128,128], index: 5, kind: output, shape index: {}]
  %s6 = sld [smem:[#allocation0]]
  $region58: #{tpu_custom_call.1} parent=0
    _
  %s8 = ssub.s32 1, %s6
  %s9 = scalar_select 0, %s8, %s6
  $region1: #{tpu_custom_call.1} parent=0
    #allocation3 [shape = 'u8[32768]{0}', space=vmem, size = 0x8000, scoped, tag = 'input window, operand 0, single buffered']
    #allocation4 [shape = 's32[1]{0}', space=sflag, size = 0x4, scoped, tag = 'scoped memory for tpu_custom_call.1']
    #allocation5 [shape = 's32[1]{0}', space=sflag, size = 0x4, scoped, tag = 'scoped memory for tpu_custom_call.1']
    #allocation6 [shape = 'u8[32768]{0}', space=vmem, size = 0x8000, scoped, tag = 'input window, operand 1, single buffered']
    #allocation7 [shape = 's32[1]{0}', space=sflag, size = 0x4, scoped, tag = 'scoped memory for tpu_custom_call.1']
    #allocation8 [shape = 'u8[32768]{0}', space=vmem, size = 0x8000, scoped, tag = 'input window, operand 2, single buffered']
    #allocation9 [shape = 'u8[32768]{0}', space=vmem, size = 0x8000, scoped, tag = 'input window, operand 4, single buffered']
    #allocation10 [shape = 's32[1]{0}', space=sflag, size = 0x4, scoped, tag = 'scoped memory for tpu_custom_call.1']
    #allocation11 [shape = 'u8[32768]{0}', space=vmem, size = 0x8000, scoped, tag = 'output window, operand 0, single buffered']
    %10 = vsyncpa [#allocation4], 0
    %11 = vsyncpa [#allocation7], 0
    %12 = vsyncpa [#allocation10], 0
    %13 = vsyncpa [#allocation5], 0
    // Predicated region
    $region2: #{tpu_custom_call.1} parent=1 // pred_check
      _
    $region3: #{tpu_custom_call.1} parent=1 // pred_check_branch
      %15 = sbr.rel (0) target = $region5
    $region4: #{tpu_custom_call.1} parent=1 // pred_region
      %s17 = ssub.s32 1024, 1024
      %18 = vsyncadd [#allocation4], %s17
      %s19 = sshll.u32 [#allocation3], 4
      %s20 = int_to_ptr.vmem [resolvable:$true] %s19
      %25 = dma.hbm_to_vmem [thread:$0]  %s0, 1024, %s20, [#allocation4], 64, 64, 4
    $region5: #{tpu_custom_call.1} parent=1 // pred_fallthru
      _
    // Predicated region
    $region6: #{tpu_custom_call.1} parent=1 // pred_check
      _
    $region7: #{tpu_custom_call.1} parent=1 // pred_check_branch
      %27 = sbr.rel (0) target = $region9
    $region8: #{tpu_custom_call.1} parent=1 // pred_region
      %s29 = ssub.s32 1024, 1024
      %30 = vsyncadd [#allocation7], %s29
      %s31 = sshll.u32 [#allocation6], 4
      %s32 = int_to_ptr.vmem [resolvable:$true] %s31
      %37 = dma.hbm_to_vmem [thread:$0]  %s1, 1024, %s32, [#allocation7], 64, 64, 4
    $region9: #{tpu_custom_call.1} parent=1 // pred_fallthru
      _
    // Predicated region
    $region10: #{tpu_custom_call.1} parent=1 // pred_check
      _
    $region11: #{tpu_custom_call.1} parent=1 // pred_check_branch
      %39 = sbr.rel (0) target = $region13
    $region12: #{tpu_custom_call.1} parent=1 // pred_region
      %s41 = ssub.s32 1024, 1024
      %42 = vsyncadd [#allocation7], %s41
      %s43 = sshll.u32 [#allocation8], 4
      %s44 = int_to_ptr.vmem [resolvable:$true] %s43
      %49 = dma.hbm_to_vmem [thread:$0]  %s2, 1024, %s44, [#allocation7], 64, 64, 4
    $region13: #{tpu_custom_call.1} parent=1 // pred_fallthru
      _
    // Predicated region
    $region14: #{tpu_custom_call.1} parent=1 // pred_check
      _
    $region15: #{tpu_custom_call.1} parent=1 // pred_check_branch
      %51 = sbr.rel (0) target = $region17
    $region16: #{tpu_custom_call.1} parent=1 // pred_region
      _
    $region17: #{tpu_custom_call.1} parent=1 // pred_fallthru
      _
    // Predicated region
    $region18: #{tpu_custom_call.1} parent=1 // pred_check
      _
    $region19: #{tpu_custom_call.1} parent=1 // pred_check_branch
      %53 = sbr.rel (0) target = $region21
    $region20: #{tpu_custom_call.1} parent=1 // pred_region
      %s55 = ssub.s32 1024, 1024
      %56 = vsyncadd [#allocation10], %s55
      %s57 = sshll.u32 [#allocation9], 4
      %s58 = int_to_ptr.vmem [resolvable:$true] %s57
      %63 = dma.hbm_to_vmem [thread:$0]  %s4, 1024, %s58, [#allocation10], 64, 64, 4
    $region21: #{tpu_custom_call.1} parent=1 // pred_fallthru
      _
    // Predicated region
    $region22: #{tpu_custom_call.1} parent=1 // pred_check
      _
    $region23: #{tpu_custom_call.1} parent=1 // pred_check_branch
      %65 = sbr.rel (0) target = $region25
    $region24: #{tpu_custom_call.1} parent=1 // pred_region
      %66 = dma.done [#allocation4], 1024
    $region25: #{tpu_custom_call.1} parent=1 // pred_fallthru
      _
    // Predicated region
    $region26: #{tpu_custom_call.1} parent=1 // pred_check
      _
    $region27: #{tpu_custom_call.1} parent=1 // pred_check_branch
      %68 = sbr.rel (0) target = $region29
    $region28: #{tpu_custom_call.1} parent=1 // pred_region
      %69 = dma.done [#allocation7], 1024
    $region29: #{tpu_custom_call.1} parent=1 // pred_fallthru
      _
    // Predicated region
    $region30: #{tpu_custom_call.1} parent=1 // pred_check
      _
    $region31: #{tpu_custom_call.1} parent=1 // pred_check_branch
      %71 = sbr.rel (0) target = $region33
    $region32: #{tpu_custom_call.1} parent=1 // pred_region
      %72 = dma.done [#allocation7], 1024
    $region33: #{tpu_custom_call.1} parent=1 // pred_fallthru
      _
    // Predicated region
    $region34: #{tpu_custom_call.1} parent=1 // pred_check
      _
    $region35: #{tpu_custom_call.1} parent=1 // pred_check_branch
      %74 = sbr.rel (0) target = $region37
    $region36: #{tpu_custom_call.1} parent=1 // pred_region
      %75 = dma.done [#allocation10], 1024
    $region37: #{tpu_custom_call.1} parent=1 // pred_fallthru
      _
    %v77 = vld [vmem:[#allocation6] sm:$0xf]
    %v78 = vld [vmem:[#allocation6 + $0x4] sm:$0xf]
    %v79 = vld [vmem:[#allocation6 + $0x8] sm:$0xf]
    %v80 = vld [vmem:[#allocation6 + $0xc] sm:$0xf]
    %v81 = vld [vmem:[#allocation6 + $0x10] sm:$0xf]
    %v82 = vld [vmem:[#allocation6 + $0x14] sm:$0xf]
    %v83 = vld [vmem:[#allocation6 + $0x18] sm:$0xf]
    %v84 = vld [vmem:[#allocation6 + $0x1c] sm:$0xf]
    %v85 = vld [vmem:[#allocation6 + $0x20] sm:$0xf]
    %v86 = vld [vmem:[#allocation6 + $0x24] sm:$0xf]
    %v87 = vld [vmem:[#allocation6 + $0x28] sm:$0xf]
    %v88 = vld [vmem:[#allocation6 + $0x2c] sm:$0xf]
    %v89 = vld [vmem:[#allocation6 + $0x30] sm:$0xf]
    %v90 = vld [vmem:[#allocation6 + $0x34] sm:$0xf]
    %v91 = vld [vmem:[#allocation6 + $0x38] sm:$0xf]
    %v92 = vld [vmem:[#allocation6 + $0x3c] sm:$0xf]
    %v93 = vld [vmem:[#allocation8] sm:$0xf]
    %v94 = vld [vmem:[#allocation8 + $0x4] sm:$0xf]
    %v95 = vld [vmem:[#allocation8 + $0x8] sm:$0xf]
    %v96 = vld [vmem:[#allocation8 + $0xc] sm:$0xf]
    %v97 = vld [vmem:[#allocation8 + $0x10] sm:$0xf]
    %v98 = vld [vmem:[#allocation8 + $0x14] sm:$0xf]
    %v99 = vld [vmem:[#allocation8 + $0x18] sm:$0xf]
    %v100 = vld [vmem:[#allocation8 + $0x1c] sm:$0xf]
    %v101 = vld [vmem:[#allocation8 + $0x20] sm:$0xf]
    %v102 = vld [vmem:[#allocation8 + $0x24] sm:$0xf]
    %v103 = vld [vmem:[#allocation8 + $0x28] sm:$0xf]
    %v104 = vld [vmem:[#allocation8 + $0x2c] sm:$0xf]
    %v105 = vld [vmem:[#allocation8 + $0x30] sm:$0xf]
    %v106 = vld [vmem:[#allocation8 + $0x34] sm:$0xf]
    %v107 = vld [vmem:[#allocation8 + $0x38] sm:$0xf]
    %v108 = vld [vmem:[#allocation8 + $0x3c] sm:$0xf]
    %v125 = vunpack.c.l.b16 %v77
    %v126 = vunpack.c.l.b16 %v78
    %v127 = vunpack.c.l.b16 %v79
    %v128 = vunpack.c.l.b16 %v80
    %v129 = vunpack.c.l.b16 %v81
    %v130 = vunpack.c.l.b16 %v82
    %v131 = vunpack.c.l.b16 %v83
    %v132 = vunpack.c.l.b16 %v84
    %v133 = vunpack.c.l.b16 %v85
    %v134 = vunpack.c.l.b16 %v86
    %v135 = vunpack.c.l.b16 %v87
    %v136 = vunpack.c.l.b16 %v88
    %v137 = vunpack.c.l.b16 %v89
    %v138 = vunpack.c.l.b16 %v90
    %v139 = vunpack.c.l.b16 %v91
    %v140 = vunpack.c.l.b16 %v92
    %v141 = vpack.c.b16 %v126, %v125
    %v142 = vpack.c.b16 %v128, %v127
    %v143 = vpack.c.b16 %v130, %v129
    %v144 = vpack.c.b16 %v132, %v131
    %v145 = vpack.c.b16 %v134, %v133
    %v146 = vpack.c.b16 %v136, %v135
    %v147 = vpack.c.b16 %v138, %v137
    %v148 = vpack.c.b16 %v140, %v139
    %v173 = vunpack.c.l.b16 %v93
    %v174 = vunpack.c.l.b16 %v94
    %v175 = vunpack.c.l.b16 %v95
    %v176 = vunpack.c.l.b16 %v96
    %v177 = vunpack.c.l.b16 %v97
    %v178 = vunpack.c.l.b16 %v98
    %v179 = vunpack.c.l.b16 %v99
    %v180 = vunpack.c.l.b16 %v100
    %v181 = vunpack.c.l.b16 %v101
    %v182 = vunpack.c.l.b16 %v102
    %v183 = vunpack.c.l.b16 %v103
    %v184 = vunpack.c.l.b16 %v104
    %v185 = vunpack.c.l.b16 %v105
    %v186 = vunpack.c.l.b16 %v106
    %v187 = vunpack.c.l.b16 %v107
    %v188 = vunpack.c.l.b16 %v108
    %v189 = vpack.c.b16 %v174, %v173
    %v190 = vpack.c.b16 %v176, %v175
    %v191 = vpack.c.b16 %v178, %v177
    %v192 = vpack.c.b16 %v180, %v179
    %v193 = vpack.c.b16 %v182, %v181
    %v194 = vpack.c.b16 %v184, %v183
    %v195 = vpack.c.b16 %v186, %v185
    %v196 = vpack.c.b16 %v188, %v187
    %205 = vmatprep.subr.bf16.mxu0 0
    %206 = vmatpush1.bf16.msra.mxu0 %v189
    %207 = vmatprep.subr.bf16.mxu0 0
    %208 = vmatpush1.bf16.msra.mxu0 %v190
    %209 = vmatprep.subr.bf16.mxu0 0
    %210 = vmatpush1.bf16.msra.mxu0 %v191
    %211 = vmatprep.subr.bf16.mxu0 0
    %212 = vmatpush1.bf16.msra.mxu0 %v192
    %213 = vmatprep.subr.bf16.mxu0 0
    %214 = vmatpush1.bf16.msra.mxu0 %v193
    %215 = vmatprep.subr.bf16.mxu0 0
    %216 = vmatpush1.bf16.msra.mxu0 %v194
    %217 = vmatprep.subr.bf16.mxu0 0
    %218 = vmatpush1.bf16.msra.mxu0 %v195
    %219 = vmatprep.subr.bf16.mxu0 0
    %220 = vmatpush1.bf16.msra.mxu0 %v196
    %221 = vmatprep.subr.bf16.mxu0 0
    %222 = vmatpush1.bf16.msra.mxu0 0
    %223 = vmatprep.subr.bf16.mxu0 0
    %224 = vmatpush1.bf16.msra.mxu0 0
    %225 = vmatprep.subr.bf16.mxu0 0
    %226 = vmatpush1.bf16.msra.mxu0 0
    %227 = vmatprep.subr.bf16.mxu0 0
    %228 = vmatpush1.bf16.msra.mxu0 0
    %229 = vmatprep.subr.bf16.mxu0 0
    %230 = vmatpush1.bf16.msra.mxu0 0
    %231 = vmatprep.subr.bf16.mxu0 0
    %232 = vmatpush1.bf16.msra.mxu0 0
    %233 = vmatprep.subr.bf16.mxu0 0
    %234 = vmatpush1.bf16.msra.mxu0 0
    %235 = vmatprep.subr.bf16.mxu0 0
    %236 = vmatpush1.bf16.msra.mxu0 0
    %237 = vmatprep.mubr.bf16.mxu0 0
    %238 = vmatmul.mubr.bf16.gmra.mrb[0].mxu0 %v141
    %v239 = vpop.f32.mrb[0].mxu0
    %v240 = vadd.f32 0.0, %v239
    %v241 = vpop.f32.mrb[0].mxu0
    %v242 = vpop.f32.mrb[0].mxu0
    %v243 = vadd.f32 0.0, %v242
    %v244 = vpop.f32.mrb[0].mxu0
    %245 = vmatprep.mubr.bf16.mxu0 0
    %246 = vmatmul.mubr.bf16.gmra.mrb[0].mxu0 %v142
    %v247 = vpop.f32.mrb[0].mxu0
    %v248 = vadd.f32 0.0, %v247
    %v249 = vpop.f32.mrb[0].mxu0
    %v250 = vpop.f32.mrb[0].mxu0
    %v251 = vadd.f32 0.0, %v250
    %v252 = vpop.f32.mrb[0].mxu0
    %253 = vmatprep.mubr.bf16.mxu0 0
    %254 = vmatmul.mubr.bf16.gmra.mrb[0].mxu0 %v143
    %v255 = vpop.f32.mrb[0].mxu0
    %v256 = vadd.f32 0.0, %v255
    %v257 = vpop.f32.mrb[0].mxu0
    %v258 = vpop.f32.mrb[0].mxu0
    %v259 = vadd.f32 0.0, %v258
    %v260 = vpop.f32.mrb[0].mxu0
    %261 = vmatprep.mubr.bf16.mxu0 0
    %262 = vmatmul.mubr.bf16.gmra.mrb[0].mxu0 %v144
    %v263 = vpop.f32.mrb[0].mxu0
    %v264 = vadd.f32 0.0, %v263
    %v265 = vpop.f32.mrb[0].mxu0
    %v266 = vpop.f32.mrb[0].mxu0
    %v267 = vadd.f32 0.0, %v266
    %v268 = vpop.f32.mrb[0].mxu0
    %269 = vmatprep.mubr.bf16.mxu0 0
    %270 = vmatmul.mubr.bf16.gmra.mrb[0].mxu0 %v145
    %v271 = vpop.f32.mrb[0].mxu0
    %v272 = vadd.f32 0.0, %v271
    %v273 = vpop.f32.mrb[0].mxu0
    %v274 = vpop.f32.mrb[0].mxu0
    %v275 = vadd.f32 0.0, %v274
    %v276 = vpop.f32.mrb[0].mxu0
    %277 = vmatprep.mubr.bf16.mxu0 0
    %278 = vmatmul.mubr.bf16.gmra.mrb[0].mxu0 %v146
    %v279 = vpop.f32.mrb[0].mxu0
    %v280 = vadd.f32 0.0, %v279
    %v281 = vpop.f32.mrb[0].mxu0
    %v282 = vpop.f32.mrb[0].mxu0
    %v283 = vadd.f32 0.0, %v282
    %v284 = vpop.f32.mrb[0].mxu0
    %285 = vmatprep.mubr.bf16.mxu0 0
    %286 = vmatmul.mubr.bf16.gmra.mrb[0].mxu0 %v147
    %v287 = vpop.f32.mrb[0].mxu0
    %v288 = vadd.f32 0.0, %v287
    %v289 = vpop.f32.mrb[0].mxu0
    %v290 = vpop.f32.mrb[0].mxu0
    %v291 = vadd.f32 0.0, %v290
    %v292 = vpop.f32.mrb[0].mxu0
    %293 = vmatprep.mubr.bf16.mxu0 0
    %294 = vmatmul.mubr.bf16.gmra.mrb[0].mxu0 %v148
    %v295 = vpop.f32.mrb[0].mxu0
    %v296 = vadd.f32 0.0, %v295
    %v297 = vpop.f32.mrb[0].mxu0
    %v298 = vpop.f32.mrb[0].mxu0
    %v299 = vadd.f32 0.0, %v298
    %v300 = vpop.f32.mrb[0].mxu0
    %301 = vdwg.mxu0
    %v302 = vld [vmem:[#allocation3] sm:$0xf]
    %v303 = vld [vmem:[#allocation3 + $0x4] sm:$0xf]
    %v304 = vld [vmem:[#allocation3 + $0x8] sm:$0xf]
    %v305 = vld [vmem:[#allocation3 + $0xc] sm:$0xf]
    %v306 = vld [vmem:[#allocation3 + $0x10] sm:$0xf]
    %v307 = vld [vmem:[#allocation3 + $0x14] sm:$0xf]
    %v308 = vld [vmem:[#allocation3 + $0x18] sm:$0xf]
    %v309 = vld [vmem:[#allocation3 + $0x1c] sm:$0xf]
    %v310 = vld [vmem:[#allocation3 + $0x20] sm:$0xf]
    %v311 = vld [vmem:[#allocation3 + $0x24] sm:$0xf]
    %v312 = vld [vmem:[#allocation3 + $0x28] sm:$0xf]
    %v313 = vld [vmem:[#allocation3 + $0x2c] sm:$0xf]
    %v314 = vld [vmem:[#allocation3 + $0x30] sm:$0xf]
    %v315 = vld [vmem:[#allocation3 + $0x34] sm:$0xf]
    %v316 = vld [vmem:[#allocation3 + $0x38] sm:$0xf]
    %v317 = vld [vmem:[#allocation3 + $0x3c] sm:$0xf]
    %v318 = vpack.c.bf16 %v243, %v240
    %v319 = vpack.c.bf16 %v251, %v248
    %v320 = vpack.c.bf16 %v259, %v256
    %v321 = vpack.c.bf16 %v267, %v264
    %v322 = vpack.c.bf16 %v275, %v272
    %v323 = vpack.c.bf16 %v283, %v280
    %v324 = vpack.c.bf16 %v291, %v288
    %v325 = vpack.c.bf16 %v299, %v296
    %v342 = vunpack.c.l.b16 %v302
    %v343 = vunpack.c.l.b16 %v303
    %v344 = vunpack.c.l.b16 %v304
    %v345 = vunpack.c.l.b16 %v305
    %v346 = vunpack.c.l.b16 %v306
    %v347 = vunpack.c.l.b16 %v307
    %v348 = vunpack.c.l.b16 %v308
    %v349 = vunpack.c.l.b16 %v309
    %v350 = vunpack.c.l.b16 %v310
    %v351 = vunpack.c.l.b16 %v311
    %v352 = vunpack.c.l.b16 %v312
    %v353 = vunpack.c.l.b16 %v313
    %v354 = vunpack.c.l.b16 %v314
    %v355 = vunpack.c.l.b16 %v315
    %v356 = vunpack.c.l.b16 %v316
    %v357 = vunpack.c.l.b16 %v317
    %v358 = vpack.c.b16 %v343, %v342
    %v359 = vpack.c.b16 %v345, %v344
    %v360 = vpack.c.b16 %v347, %v346
    %v361 = vpack.c.b16 %v349, %v348
    %v362 = vpack.c.b16 %v351, %v350
    %v363 = vpack.c.b16 %v353, %v352
    %v364 = vpack.c.b16 %v355, %v354
    %v365 = vpack.c.b16 %v357, %v356
    %374 = vmatprep.subr.bf16.mxu0 0
    %375 = vmatpush1.bf16.msra.mxu0 %v318
    %376 = vmatprep.subr.bf16.mxu0 0
    %377 = vmatpush1.bf16.msra.mxu0 %v319
    %378 = vmatprep.subr.bf16.mxu0 0
    %379 = vmatpush1.bf16.msra.mxu0 %v320
    %380 = vmatprep.subr.bf16.mxu0 0
    %381 = vmatpush1.bf16.msra.mxu0 %v321
    %382 = vmatprep.subr.bf16.mxu0 0
    %383 = vmatpush1.bf16.msra.mxu0 %v322
    %384 = vmatprep.subr.bf16.mxu0 0
    %385 = vmatpush1.bf16.msra.mxu0 %v323
    %386 = vmatprep.subr.bf16.mxu0 0
    %387 = vmatpush1.bf16.msra.mxu0 %v324
    %388 = vmatprep.subr.bf16.mxu0 0
    %389 = vmatpush1.bf16.msra.mxu0 %v325
    %390 = vmatprep.subr.bf16.mxu0 0
    %391 = vmatpush1.bf16.msra.mxu0 0
    %392 = vmatprep.subr.bf16.mxu0 0
    %393 = vmatpush1.bf16.msra.mxu0 0
    %394 = vmatprep.subr.bf16.mxu0 0
    %395 = vmatpush1.bf16.msra.mxu0 0
    %396 = vmatprep.subr.bf16.mxu0 0
    %397 = vmatpush1.bf16.msra.mxu0 0
    %398 = vmatprep.subr.bf16.mxu0 0
    %399 = vmatpush1.bf16.msra.mxu0 0
    %400 = vmatprep.subr.bf16.mxu0 0
    %401 = vmatpush1.bf16.msra.mxu0 0
    %402 = vmatprep.subr.bf16.mxu0 0
    %403 = vmatpush1.bf16.msra.mxu0 0
    %404 = vmatprep.subr.bf16.mxu0 0
    %405 = vmatpush1.bf16.msra.mxu0 0
    %406 = vmatprep.mubr.bf16.mxu0 0
    %407 = vmatmul.mubr.bf16.gmra.mrb[0].mxu0 %v358
    %v408 = vpop.f32.mrb[0].mxu0
    %v409 = vadd.f32 0.0, %v408
    %v410 = vpop.f32.mrb[0].mxu0
    %v411 = vpop.f32.mrb[0].mxu0
    %v412 = vadd.f32 0.0, %v411
    %v413 = vpop.f32.mrb[0].mxu0
    %414 = vmatprep.mubr.bf16.mxu0 0
    %415 = vmatmul.mubr.bf16.gmra.mrb[0].mxu0 %v359
    %v416 = vpop.f32.mrb[0].mxu0
    %v417 = vadd.f32 0.0, %v416
    %v418 = vpop.f32.mrb[0].mxu0
    %v419 = vpop.f32.mrb[0].mxu0
    %v420 = vadd.f32 0.0, %v419
    %v421 = vpop.f32.mrb[0].mxu0
    %422 = vmatprep.mubr.bf16.mxu0 0
    %423 = vmatmul.mubr.bf16.gmra.mrb[0].mxu0 %v360
    %v424 = vpop.f32.mrb[0].mxu0
    %v425 = vadd.f32 0.0, %v424
    %v426 = vpop.f32.mrb[0].mxu0
    %v427 = vpop.f32.mrb[0].mxu0
    %v428 = vadd.f32 0.0, %v427
    %v429 = vpop.f32.mrb[0].mxu0
    %430 = vmatprep.mubr.bf16.mxu0 0
    %431 = vmatmul.mubr.bf16.gmra.mrb[0].mxu0 %v361
    %v432 = vpop.f32.mrb[0].mxu0
    %v433 = vadd.f32 0.0, %v432
    %v434 = vpop.f32.mrb[0].mxu0
    %v435 = vpop.f32.mrb[0].mxu0
    %v436 = vadd.f32 0.0, %v435
    %v437 = vpop.f32.mrb[0].mxu0
    %438 = vmatprep.mubr.bf16.mxu0 0
    %439 = vmatmul.mubr.bf16.gmra.mrb[0].mxu0 %v362
    %v440 = vpop.f32.mrb[0].mxu0
    %v441 = vadd.f32 0.0, %v440
    %v442 = vpop.f32.mrb[0].mxu0
    %v443 = vpop.f32.mrb[0].mxu0
    %v444 = vadd.f32 0.0, %v443
    %v445 = vpop.f32.mrb[0].mxu0
    %446 = vmatprep.mubr.bf16.mxu0 0
    %447 = vmatmul.mubr.bf16.gmra.mrb[0].mxu0 %v363
    %v448 = vpop.f32.mrb[0].mxu0
    %v449 = vadd.f32 0.0, %v448
    %v450 = vpop.f32.mrb[0].mxu0
    %v451 = vpop.f32.mrb[0].mxu0
    %v452 = vadd.f32 0.0, %v451
    %v453 = vpop.f32.mrb[0].mxu0
    %454 = vmatprep.mubr.bf16.mxu0 0
    %455 = vmatmul.mubr.bf16.gmra.mrb[0].mxu0 %v364
    %v456 = vpop.f32.mrb[0].mxu0
    %v457 = vadd.f32 0.0, %v456
    %v458 = vpop.f32.mrb[0].mxu0
    %v459 = vpop.f32.mrb[0].mxu0
    %v460 = vadd.f32 0.0, %v459
    %v461 = vpop.f32.mrb[0].mxu0
    %462 = vmatprep.mubr.bf16.mxu0 0
    %463 = vmatmul.mubr.bf16.gmra.mrb[0].mxu0 %v365
    %v464 = vpop.f32.mrb[0].mxu0
    %v465 = vadd.f32 0.0, %v464
    %v466 = vpop.f32.mrb[0].mxu0
    %v467 = vpop.f32.mrb[0].mxu0
    %v468 = vadd.f32 0.0, %v467
    %v469 = vpop.f32.mrb[0].mxu0
    %470 = vdwg.mxu0
    %p471 = scmp.eq.s32.totalorder 0, 0
    // Predicated region
    $region38: #{tpu_custom_call.1} parent=1 // pred_check
      %p472 = pneg %p471
    $region39: #{tpu_custom_call.1} parent=1 // pred_check_branch
      %474 = sbr.rel (%p472) target = $region41
    $region40: #{tpu_custom_call.1} parent=1 // pred_region
      %475 = vst [vmem:[#allocation2] sm:$0xff] %v409
      %476 = vst [vmem:[#allocation2 + $0x8] sm:$0xff] %v412
      %477 = vst [vmem:[#allocation2 + $0x10] sm:$0xff] %v417
      %478 = vst [vmem:[#allocation2 + $0x18] sm:$0xff] %v420
      %479 = vst [vmem:[#allocation2 + $0x20] sm:$0xff] %v425
      %480 = vst [vmem:[#allocation2 + $0x28] sm:$0xff] %v428
      %481 = vst [vmem:[#allocation2 + $0x30] sm:$0xff] %v433
      %482 = vst [vmem:[#allocation2 + $0x38] sm:$0xff] %v436
      %483 = vst [vmem:[#allocation2 + $0x40] sm:$0xff] %v441
      %484 = vst [vmem:[#allocation2 + $0x48] sm:$0xff] %v444
      %485 = vst [vmem:[#allocation2 + $0x50] sm:$0xff] %v449
      %486 = vst [vmem:[#allocation2 + $0x58] sm:$0xff] %v452
      %487 = vst [vmem:[#allocation2 + $0x60] sm:$0xff] %v457
      %488 = vst [vmem:[#allocation2 + $0x68] sm:$0xff] %v460
      %489 = vst [vmem:[#allocation2 + $0x70] sm:$0xff] %v465
      %490 = vst [vmem:[#allocation2 + $0x78] sm:$0xff] %v468
    $region41: #{tpu_custom_call.1} parent=1 // pred_fallthru
      _
    %p491 = scmp.gt.s32.totalorder 0, 0
    // Predicated region
    $region42: #{tpu_custom_call.1} parent=1 // pred_check
      %p492 = pneg %p491
    $region43: #{tpu_custom_call.1} parent=1 // pred_check_branch
      %494 = sbr.rel (%p492) target = $region45
    $region44: #{tpu_custom_call.1} parent=1 // pred_region
      %v495 = vld [vmem:[#allocation2] sm:$0xff]
      %v496 = vld [vmem:[#allocation2 + $0x8] sm:$0xff]
      %v497 = vld [vmem:[#allocation2 + $0x10] sm:$0xff]
      %v498 = vld [vmem:[#allocation2 + $0x18] sm:$0xff]
      %v499 = vld [vmem:[#allocation2 + $0x20] sm:$0xff]
      %v500 = vld [vmem:[#allocation2 + $0x28] sm:$0xff]
      %v501 = vld [vmem:[#allocation2 + $0x30] sm:$0xff]
      %v502 = vld [vmem:[#allocation2 + $0x38] sm:$0xff]
      %v503 = vld [vmem:[#allocation2 + $0x40] sm:$0xff]
      %v504 = vld [vmem:[#allocation2 + $0x48] sm:$0xff]
      %v505 = vld [vmem:[#allocation2 + $0x50] sm:$0xff]
      %v506 = vld [vmem:[#allocation2 + $0x58] sm:$0xff]
      %v507 = vld [vmem:[#allocation2 + $0x60] sm:$0xff]
      %v508 = vld [vmem:[#allocation2 + $0x68] sm:$0xff]
      %v509 = vld [vmem:[#allocation2 + $0x70] sm:$0xff]
      %v510 = vld [vmem:[#allocation2 + $0x78] sm:$0xff]
      %v511 = vadd.f32 %v495, %v409
      %v512 = vadd.f32 %v496, %v412
      %v513 = vadd.f32 %v497, %v417
      %v514 = vadd.f32 %v498, %v420
      %v515 = vadd.f32 %v499, %v425
      %v516 = vadd.f32 %v500, %v428
      %v517 = vadd.f32 %v501, %v433
      %v518 = vadd.f32 %v502, %v436
      %v519 = vadd.f32 %v503, %v441
      %v520 = vadd.f32 %v504, %v444
      %v521 = vadd.f32 %v505, %v449
      %v522 = vadd.f32 %v506, %v452
      %v523 = vadd.f32 %v507, %v457
      %v524 = vadd.f32 %v508, %v460
      %v525 = vadd.f32 %v509, %v465
      %v526 = vadd.f32 %v510, %v468
      %527 = vst [vmem:[#allocation2] sm:$0xff] %v511
      %528 = vst [vmem:[#allocation2 + $0x8] sm:$0xff] %v512
      %529 = vst [vmem:[#allocation2 + $0x10] sm:$0xff] %v513
      %530 = vst [vmem:[#allocation2 + $0x18] sm:$0xff] %v514
      %531 = vst [vmem:[#allocation2 + $0x20] sm:$0xff] %v515
      %532 = vst [vmem:[#allocation2 + $0x28] sm:$0xff] %v516
      %533 = vst [vmem:[#allocation2 + $0x30] sm:$0xff] %v517
      %534 = vst [vmem:[#allocation2 + $0x38] sm:$0xff] %v518
      %535 = vst [vmem:[#allocation2 + $0x40] sm:$0xff] %v519
      %536 = vst [vmem:[#allocation2 + $0x48] sm:$0xff] %v520
      %537 = vst [vmem:[#allocation2 + $0x50] sm:$0xff] %v521
      %538 = vst [vmem:[#allocation2 + $0x58] sm:$0xff] %v522
      %539 = vst [vmem:[#allocation2 + $0x60] sm:$0xff] %v523
      %540 = vst [vmem:[#allocation2 + $0x68] sm:$0xff] %v524
      %541 = vst [vmem:[#allocation2 + $0x70] sm:$0xff] %v525
      %542 = vst [vmem:[#allocation2 + $0x78] sm:$0xff] %v526
    $region45: #{tpu_custom_call.1} parent=1 // pred_fallthru
      _
    // Predicated region
    $region46: #{tpu_custom_call.1} parent=1 // pred_check
      %p543 = pneg %p471
    $region47: #{tpu_custom_call.1} parent=1 // pred_check_branch
      %545 = sbr.rel (%p543) target = $region49
    $region48: #{tpu_custom_call.1} parent=1 // pred_region
      %v546 = vld [vmem:[#allocation2] sm:$0xff]
      %v547 = vld [vmem:[#allocation2 + $0x8] sm:$0xff]
      %v548 = vld [vmem:[#allocation2 + $0x10] sm:$0xff]
      %v549 = vld [vmem:[#allocation2 + $0x18] sm:$0xff]
      %v550 = vld [vmem:[#allocation2 + $0x20] sm:$0xff]
      %v551 = vld [vmem:[#allocation2 + $0x28] sm:$0xff]
      %v552 = vld [vmem:[#allocation2 + $0x30] sm:$0xff]
      %v553 = vld [vmem:[#allocation2 + $0x38] sm:$0xff]
      %v554 = vld [vmem:[#allocation2 + $0x40] sm:$0xff]
      %v555 = vld [vmem:[#allocation2 + $0x48] sm:$0xff]
      %v556 = vld [vmem:[#allocation2 + $0x50] sm:$0xff]
      %v557 = vld [vmem:[#allocation2 + $0x58] sm:$0xff]
      %v558 = vld [vmem:[#allocation2 + $0x60] sm:$0xff]
      %v559 = vld [vmem:[#allocation2 + $0x68] sm:$0xff]
      %v560 = vld [vmem:[#allocation2 + $0x70] sm:$0xff]
      %v561 = vld [vmem:[#allocation2 + $0x78] sm:$0xff]
      %v562 = vld [vmem:[%s3] sm:$0x1]
      %v564 = vlaneseq
      %v565 = vshrl.u32 %v564, 7
      %v566 = vsub.s32 0, %v565
      %v567 = vrot.slane %v562, %v566
      %v569 = vadd.f32 %v546, %v567
      %v570 = vadd.f32 %v547, %v567
      %v571 = vadd.f32 %v548, %v567
      %v572 = vadd.f32 %v549, %v567
      %v573 = vadd.f32 %v550, %v567
      %v574 = vadd.f32 %v551, %v567
      %v575 = vadd.f32 %v552, %v567
      %v576 = vadd.f32 %v553, %v567
      %v577 = vadd.f32 %v554, %v567
      %v578 = vadd.f32 %v555, %v567
      %v579 = vadd.f32 %v556, %v567
      %v580 = vadd.f32 %v557, %v567
      %v581 = vadd.f32 %v558, %v567
      %v582 = vadd.f32 %v559, %v567
      %v583 = vadd.f32 %v560, %v567
      %v584 = vadd.f32 %v561, %v567
      %v585 = vmax.f32 %v569, 0.0
      %v586 = vmax.f32 %v570, 0.0
      %v587 = vmax.f32 %v571, 0.0
      %v588 = vmax.f32 %v572, 0.0
      %v589 = vmax.f32 %v573, 0.0
      %v590 = vmax.f32 %v574, 0.0
      %v591 = vmax.f32 %v575, 0.0
      %v592 = vmax.f32 %v576, 0.0
      %v593 = vmax.f32 %v577, 0.0
      %v594 = vmax.f32 %v578, 0.0
      %v595 = vmax.f32 %v579, 0.0
      %v596 = vmax.f32 %v580, 0.0
      %v597 = vmax.f32 %v581, 0.0
      %v598 = vmax.f32 %v582, 0.0
      %v599 = vmax.f32 %v583, 0.0
      %v600 = vmax.f32 %v584, 0.0
      %v601 = vpack.c.bf16 %v586, %v585
      %v602 = vpack.c.bf16 %v588, %v587
      %v603 = vpack.c.bf16 %v590, %v589
      %v604 = vpack.c.bf16 %v592, %v591
      %v605 = vpack.c.bf16 %v594, %v593
      %v606 = vpack.c.bf16 %v596, %v595
      %v607 = vpack.c.bf16 %v598, %v597
      %v608 = vpack.c.bf16 %v600, %v599
      %v609 = vld [vmem:[#allocation9] sm:$0xf]
      %v610 = vld [vmem:[#allocation9 + $0x4] sm:$0xf]
      %v611 = vld [vmem:[#allocation9 + $0x8] sm:$0xf]
      %v612 = vld [vmem:[#allocation9 + $0xc] sm:$0xf]
      %v613 = vld [vmem:[#allocation9 + $0x10] sm:$0xf]
      %v614 = vld [vmem:[#allocation9 + $0x14] sm:$0xf]
      %v615 = vld [vmem:[#allocation9 + $0x18] sm:$0xf]
      %v616 = vld [vmem:[#allocation9 + $0x1c] sm:$0xf]
      %v617 = vld [vmem:[#allocation9 + $0x20] sm:$0xf]
      %v618 = vld [vmem:[#allocation9 + $0x24] sm:$0xf]
      %v619 = vld [vmem:[#allocation9 + $0x28] sm:$0xf]
      %v620 = vld [vmem:[#allocation9 + $0x2c] sm:$0xf]
      %v621 = vld [vmem:[#allocation9 + $0x30] sm:$0xf]
      %v622 = vld [vmem:[#allocation9 + $0x34] sm:$0xf]
      %v623 = vld [vmem:[#allocation9 + $0x38] sm:$0xf]
      %v624 = vld [vmem:[#allocation9 + $0x3c] sm:$0xf]
      %v641 = vunpack.c.l.b16 %v609
      %v642 = vunpack.c.l.b16 %v610
      %v643 = vunpack.c.l.b16 %v611
      %v644 = vunpack.c.l.b16 %v612
      %v645 = vunpack.c.l.b16 %v613
      %v646 = vunpack.c.l.b16 %v614
      %v647 = vunpack.c.l.b16 %v615
      %v648 = vunpack.c.l.b16 %v616
      %v649 = vunpack.c.l.b16 %v617
      %v650 = vunpack.c.l.b16 %v618
      %v651 = vunpack.c.l.b16 %v619
      %v652 = vunpack.c.l.b16 %v620
      %v653 = vunpack.c.l.b16 %v621
      %v654 = vunpack.c.l.b16 %v622
      %v655 = vunpack.c.l.b16 %v623
      %v656 = vunpack.c.l.b16 %v624
      %v657 = vpack.c.b16 %v642, %v641
      %v658 = vpack.c.b16 %v644, %v643
      %v659 = vpack.c.b16 %v646, %v645
      %v660 = vpack.c.b16 %v648, %v647
      %v661 = vpack.c.b16 %v650, %v649
      %v662 = vpack.c.b16 %v652, %v651
      %v663 = vpack.c.b16 %v654, %v653
      %v664 = vpack.c.b16 %v656, %v655
      %673 = vmatprep.subr.bf16.mxu0 0
      %674 = vmatpush1.bf16.msra.mxu0 %v657
      %675 = vmatprep.subr.bf16.mxu0 0
      %676 = vmatpush1.bf16.msra.mxu0 %v658
      %677 = vmatprep.subr.bf16.mxu0 0
      %678 = vmatpush1.bf16.msra.mxu0 %v659
      %679 = vmatprep.subr.bf16.mxu0 0
      %680 = vmatpush1.bf16.msra.mxu0 %v660
      %681 = vmatprep.subr.bf16.mxu0 0
      %682 = vmatpush1.bf16.msra.mxu0 %v661
      %683 = vmatprep.subr.bf16.mxu0 0
      %684 = vmatpush1.bf16.msra.mxu0 %v662
      %685 = vmatprep.subr.bf16.mxu0 0
      %686 = vmatpush1.bf16.msra.mxu0 %v663
      %687 = vmatprep.subr.bf16.mxu0 0
      %688 = vmatpush1.bf16.msra.mxu0 %v664
      %689 = vmatprep.subr.bf16.mxu0 0
      %690 = vmatpush1.bf16.msra.mxu0 0
      %691 = vmatprep.subr.bf16.mxu0 0
      %692 = vmatpush1.bf16.msra.mxu0 0
      %693 = vmatprep.subr.bf16.mxu0 0
      %694 = vmatpush1.bf16.msra.mxu0 0
      %695 = vmatprep.subr.bf16.mxu0 0
      %696 = vmatpush1.bf16.msra.mxu0 0
      %697 = vmatprep.subr.bf16.mxu0 0
      %698 = vmatpush1.bf16.msra.mxu0 0
      %699 = vmatprep.subr.bf16.mxu0 0
      %700 = vmatpush1.bf16.msra.mxu0 0
      %701 = vmatprep.subr.bf16.mxu0 0
      %702 = vmatpush1.bf16.msra.mxu0 0
      %703 = vmatprep.subr.bf16.mxu0 0
      %704 = vmatpush1.bf16.msra.mxu0 0
      %705 = vmatprep.mubr.bf16.mxu0 0
      %706 = vmatmul.mubr.bf16.gmra.mrb[0].mxu0 %v601
      %v707 = vpop.f32.mrb[0].mxu0
      %v708 = vadd.f32 0.0, %v707
      %v709 = vpop.f32.mrb[0].mxu0
      %v710 = vpop.f32.mrb[0].mxu0
      %v711 = vadd.f32 0.0, %v710
      %v712 = vpop.f32.mrb[0].mxu0
      %713 = vmatprep.mubr.bf16.mxu0 0
      %714 = vmatmul.mubr.bf16.gmra.mrb[0].mxu0 %v602
      %v715 = vpop.f32.mrb[0].mxu0
      %v716 = vadd.f32 0.0, %v715
      %v717 = vpop.f32.mrb[0].mxu0
      %v718 = vpop.f32.mrb[0].mxu0
      %v719 = vadd.f32 0.0, %v718
      %v720 = vpop.f32.mrb[0].mxu0
      %721 = vmatprep.mubr.bf16.mxu0 0
      %722 = vmatmul.mubr.bf16.gmra.mrb[0].mxu0 %v603
      %v723 = vpop.f32.mrb[0].mxu0
      %v724 = vadd.f32 0.0, %v723
      %v725 = vpop.f32.mrb[0].mxu0
      %v726 = vpop.f32.mrb[0].mxu0
      %v727 = vadd.f32 0.0, %v726
      %v728 = vpop.f32.mrb[0].mxu0
      %729 = vmatprep.mubr.bf16.mxu0 0
      %730 = vmatmul.mubr.bf16.gmra.mrb[0].mxu0 %v604
      %v731 = vpop.f32.mrb[0].mxu0
      %v732 = vadd.f32 0.0, %v731
      %v733 = vpop.f32.mrb[0].mxu0
      %v734 = vpop.f32.mrb[0].mxu0
      %v735 = vadd.f32 0.0, %v734
      %v736 = vpop.f32.mrb[0].mxu0
      %737 = vmatprep.mubr.bf16.mxu0 0
      %738 = vmatmul.mubr.bf16.gmra.mrb[0].mxu0 %v605
      %v739 = vpop.f32.mrb[0].mxu0
      %v740 = vadd.f32 0.0, %v739
      %v741 = vpop.f32.mrb[0].mxu0
      %v742 = vpop.f32.mrb[0].mxu0
      %v743 = vadd.f32 0.0, %v742
      %v744 = vpop.f32.mrb[0].mxu0
      %745 = vmatprep.mubr.bf16.mxu0 0
      %746 = vmatmul.mubr.bf16.gmra.mrb[0].mxu0 %v606
      %v747 = vpop.f32.mrb[0].mxu0
      %v748 = vadd.f32 0.0, %v747
      %v749 = vpop.f32.mrb[0].mxu0
      %v750 = vpop.f32.mrb[0].mxu0
      %v751 = vadd.f32 0.0, %v750
      %v752 = vpop.f32.mrb[0].mxu0
      %753 = vmatprep.mubr.bf16.mxu0 0
      %754 = vmatmul.mubr.bf16.gmra.mrb[0].mxu0 %v607
      %v755 = vpop.f32.mrb[0].mxu0
      %v756 = vadd.f32 0.0, %v755
      %v757 = vpop.f32.mrb[0].mxu0
      %v758 = vpop.f32.mrb[0].mxu0
      %v759 = vadd.f32 0.0, %v758
      %v760 = vpop.f32.mrb[0].mxu0
      %761 = vmatprep.mubr.bf16.mxu0 0
      %762 = vmatmul.mubr.bf16.gmra.mrb[0].mxu0 %v608
      %v763 = vpop.f32.mrb[0].mxu0
      %v764 = vadd.f32 0.0, %v763
      %v765 = vpop.f32.mrb[0].mxu0
      %v766 = vpop.f32.mrb[0].mxu0
      %v767 = vadd.f32 0.0, %v766
      %v768 = vpop.f32.mrb[0].mxu0
      %769 = vdwg.mxu0
      %v770 = vpack.c.bf16 %v711, %v708
      %v771 = vpack.c.bf16 %v719, %v716
      %v772 = vpack.c.bf16 %v727, %v724
      %v773 = vpack.c.bf16 %v735, %v732
      %v774 = vpack.c.bf16 %v743, %v740
      %v775 = vpack.c.bf16 %v751, %v748
      %v776 = vpack.c.bf16 %v759, %v756
      %v777 = vpack.c.bf16 %v767, %v764
      %v786 = vunpack.c.l.b16 %v770
      %v787 = vunpack.c.h.b16 %v770
      %v788 = vunpack.c.l.b16 %v771
      %v789 = vunpack.c.h.b16 %v771
      %v790 = vunpack.c.l.b16 %v772
      %v791 = vunpack.c.h.b16 %v772
      %v792 = vunpack.c.l.b16 %v773
      %v793 = vunpack.c.h.b16 %v773
      %v794 = vunpack.c.l.b16 %v774
      %v795 = vunpack.c.h.b16 %v774
      %v796 = vunpack.c.l.b16 %v775
      %v797 = vunpack.c.h.b16 %v775
      %v798 = vunpack.c.l.b16 %v776
      %v799 = vunpack.c.h.b16 %v776
      %v800 = vunpack.c.l.b16 %v777
      %v801 = vunpack.c.h.b16 %v777
      %v802 = vpack.c.b16 %v786, %v786
      %v803 = vpack.c.b16 %v787, %v787
      %v804 = vpack.c.b16 %v788, %v788
      %v805 = vpack.c.b16 %v789, %v789
      %v806 = vpack.c.b16 %v790, %v790
      %v807 = vpack.c.b16 %v791, %v791
      %v808 = vpack.c.b16 %v792, %v792
      %v809 = vpack.c.b16 %v793, %v793
      %v810 = vpack.c.b16 %v794, %v794
      %v811 = vpack.c.b16 %v795, %v795
      %v812 = vpack.c.b16 %v796, %v796
      %v813 = vpack.c.b16 %v797, %v797
      %v814 = vpack.c.b16 %v798, %v798
      %v815 = vpack.c.b16 %v799, %v799
      %v816 = vpack.c.b16 %v800, %v800
      %v817 = vpack.c.b16 %v801, %v801
      %834 = vst [vmem:[#allocation11] sm:$0xf] %v802
      %835 = vst [vmem:[#allocation11 + $0x4] sm:$0xf] %v803
      %836 = vst [vmem:[#allocation11 + $0x8] sm:$0xf] %v804
      %837 = vst [vmem:[#allocation11 + $0xc] sm:$0xf] %v805
      %838 = vst [vmem:[#allocation11 + $0x10] sm:$0xf] %v806
      %839 = vst [vmem:[#allocation11 + $0x14] sm:$0xf] %v807
      %840 = vst [vmem:[#allocation11 + $0x18] sm:$0xf] %v808
      %841 = vst [vmem:[#allocation11 + $0x1c] sm:$0xf] %v809
      %842 = vst [vmem:[#allocation11 + $0x20] sm:$0xf] %v810
      %843 = vst [vmem:[#allocation11 + $0x24] sm:$0xf] %v811
      %844 = vst [vmem:[#allocation11 + $0x28] sm:$0xf] %v812
      %845 = vst [vmem:[#allocation11 + $0x2c] sm:$0xf] %v813
      %846 = vst [vmem:[#allocation11 + $0x30] sm:$0xf] %v814
      %847 = vst [vmem:[#allocation11 + $0x34] sm:$0xf] %v815
      %848 = vst [vmem:[#allocation11 + $0x38] sm:$0xf] %v816
      %849 = vst [vmem:[#allocation11 + $0x3c] sm:$0xf] %v817
    $region49: #{tpu_custom_call.1} parent=1 // pred_fallthru
      _
    // Predicated region
    $region50: #{tpu_custom_call.1} parent=1 // pred_check
      _
    $region51: #{tpu_custom_call.1} parent=1 // pred_check_branch
      %851 = sbr.rel (0) target = $region53
    $region52: #{tpu_custom_call.1} parent=1 // pred_region
      %s853 = ssub.s32 1024, 1024
      %854 = vsyncadd [#allocation5], %s853
      %s855 = sshll.u32 [#allocation11], 4
      %s856 = int_to_ptr.vmem [resolvable:$true] %s855
      %861 = dma.vmem_to_hbm [thread:$0]  %s856, 1024, %s5, [#allocation5], 64, 64, 4
    $region53: #{tpu_custom_call.1} parent=1 // pred_fallthru
      _
    // Predicated region
    $region54: #{tpu_custom_call.1} parent=1 // pred_check
      _
    $region55: #{tpu_custom_call.1} parent=1 // pred_check_branch
      %863 = sbr.rel (0) target = $region57
    $region56: #{tpu_custom_call.1} parent=1 // pred_region
      %864 = dma.done [#allocation5], 1024
    $region57: #{tpu_custom_call.1} parent=1 // pred_fallthru
      _
    %865 = vsyncpa [#allocation4], 1
    %866 = vsyncpa [#allocation7], 1
    %867 = vsyncpa [#allocation10], 1
    %868 = vsyncpa [#allocation5], 1

</llo_original>
